<compile_context>
chip_gen: v7x
topology: tpu7x:2x2x1
jax: 0.10.0
libtpu: 0.0.40
codegen_flags: <defaults>
</compile_context>

<pallas_src>
import jax
import jax.numpy as jnp
from jax.experimental import pallas as pl
from jax.experimental.pallas import tpu as pltpu


def _linear_sub_kernel(x_ref, w_ref, bv_ref, o_ref):
    # x: (M, 2), w: (2, N) (= torch weight transposed), bv: (M, N) (= bias - v2)
    x = x_ref[...]
    w = w_ref[...]
    # K = 2 contraction as two VPU FMAs: (M,1)*(1,N) broadcasts, all in f32.
    acc = x[:, 0:1] * w[0:1, :] + x[:, 1:2] * w[1:2, :]
    o_ref[...] = acc + bv_ref[...]


def linear_sub(v1, weight, bias, v2):
    """v1:(M,2) f32, weight:(3,2) torch nn.Linear layout, bias:(3,), v2:(M,3)."""
    M, _ = v1.shape
    N = weight.shape[0]

    w_t = weight.T                      # (2, N) — lane-dense RHS layout
    bv = bias[None, :] - v2             # fold bias and v2 into one (M, N) operand

    vmem = pltpu.MemorySpace.VMEM
    out = pl.pallas_call(
        _linear_sub_kernel,
        out_shape=jax.ShapeDtypeStruct((M, N), jnp.float32),
        in_specs=[
            pl.BlockSpec(memory_space=vmem),   # v1  (M, 2)
            pl.BlockSpec(memory_space=vmem),   # w_t (2, N)
            pl.BlockSpec(memory_space=vmem),   # bv  (M, N)
        ],
        out_specs=pl.BlockSpec(memory_space=vmem),
    )(v1, w_t, bv)
    return out


if __name__ == "__main__":
    key = jax.random.PRNGKey(0)
    k_w, k_b, k_v1, k_v2 = jax.random.split(key, 4)

    # Deterministic "parameters" for nn.Linear(2, 3): weight (3,2), bias (3,).
    weight = jax.random.normal(k_w, (3, 2), jnp.float32) * 0.5
    bias = jax.random.normal(k_b, (3,), jnp.float32) * 0.1

    # Inputs matching the module: v1 (1,2), v2 (1,3).
    v1 = jax.random.normal(k_v1, (1, 2), jnp.float32)
    v2 = jax.random.normal(k_v2, (1, 3), jnp.float32)

    out = linear_sub(v1, weight, bias, v2)
    jax.block_until_ready(out)

    # Reference check in plain JAX.
    ref = v1 @ weight.T + bias - v2
    assert out.shape == (1, 3)
    assert jnp.allclose(out, ref, atol=1e-5), (out, ref)

    print("KERNEL_OK")
</pallas_src>

<mosaic_0001>
module attributes {stable_mosaic.version = 11 : i64} {
  func.func @_linear_sub_kernel(%arg0: memref<1x2xf32, #tpu.memory_space<vmem>>, %arg1: memref<2x3xf32, #tpu.memory_space<vmem>>, %arg2: memref<1x3xf32, #tpu.memory_space<vmem>>, %arg3: memref<1x3xf32, #tpu.memory_space<vmem>>) attributes {dimension_semantics = [], scalar_prefetch = 0 : i64, scratch_operands = 0 : i64, tpu.core_type = #tpu.core_type<tc>} {
    %c0 = arith.constant 0 : index
    %c0_0 = arith.constant 0 : index
    %0 = vector.load %arg0[%c0, %c0_0] : memref<1x2xf32, #tpu.memory_space<vmem>>, vector<1x2xf32>
    %c0_1 = arith.constant 0 : index
    %c0_2 = arith.constant 0 : index
    %1 = vector.load %arg1[%c0_1, %c0_2] : memref<2x3xf32, #tpu.memory_space<vmem>>, vector<2x3xf32>
    %2 = vector.extract_strided_slice %0 {offsets = [0, 0], sizes = [1, 1], strides = [1, 1]} : vector<1x2xf32> to vector<1x1xf32>
    %3 = vector.extract_strided_slice %1 {offsets = [0, 0], sizes = [1, 3], strides = [1, 1]} : vector<2x3xf32> to vector<1x3xf32>
    %4 = vector.broadcast %2 : vector<1x1xf32> to vector<1x3xf32>
    %5 = arith.mulf %4, %3 : vector<1x3xf32>
    %6 = vector.extract_strided_slice %0 {offsets = [0, 1], sizes = [1, 1], strides = [1, 1]} : vector<1x2xf32> to vector<1x1xf32>
    %7 = vector.extract_strided_slice %1 {offsets = [1, 0], sizes = [1, 3], strides = [1, 1]} : vector<2x3xf32> to vector<1x3xf32>
    %8 = vector.broadcast %6 : vector<1x1xf32> to vector<1x3xf32>
    %9 = arith.mulf %8, %7 : vector<1x3xf32>
    %10 = arith.addf %5, %9 : vector<1x3xf32>
    %c0_3 = arith.constant 0 : index
    %c0_4 = arith.constant 0 : index
    %11 = vector.load %arg2[%c0_3, %c0_4] : memref<1x3xf32, #tpu.memory_space<vmem>>, vector<1x3xf32>
    %12 = arith.addf %10, %11 : vector<1x3xf32>
    %c0_5 = arith.constant 0 : index
    %c0_6 = arith.constant 0 : index
    %13 = vector.load %arg3[%c0_5, %c0_6] : memref<1x3xf32, #tpu.memory_space<vmem>>, vector<1x3xf32>
    tpu.vector_store %arg3[%c0_5, %c0_6], %12 {strides = array<i32>} : memref<1x3xf32, #tpu.memory_space<vmem>>, vector<1x3xf32>,
    return
  }
}

</mosaic_0001>

<llo_original>
// kernel: tpu_custom_call.1
$region0: #{tpu_custom_call.1}
  #allocation0 [shape = 'u32[]', space=smem, size = 0x4, offset = 0x4, fixed_abs, tag = 'smem constant byte address 0x4 - core index']
  #allocation1 [shape = 'u32[144,128]{1,0:T(1,128)}', space=vmem, size = 0x12000, scoped, tag = 'internal scratch']
  %s0 = inlined_call_operand.hbm [shape: f32[1,2], index: 0, kind: input, shape index: {}]
  %s1 = inlined_call_operand.vmem [shape: f32[2,3], index: 1, kind: input, shape index: {}]
  %s2 = inlined_call_operand.vmem [shape: f32[1,3], index: 2, kind: input, shape index: {}]
  %s3 = inlined_call_operand.hbm [shape: f32[1,3], index: 3, kind: output, shape index: {}]
  %s4 = sld [smem:[#allocation0]]
  $region26: #{tpu_custom_call.1} parent=0
    _
  %s6 = ssub.s32 1, %s4
  %s7 = scalar_select 0, %s6, %s4
  $region1: #{tpu_custom_call.1} parent=0
    #allocation2 [shape = 'u8[512]{0}', space=vmem, size = 0x400, scoped, tag = 'input window, operand 0, single buffered']
    #allocation3 [shape = 's32[1]{0}', space=sflag, size = 0x4, scoped, tag = 'scoped memory for tpu_custom_call.1']
    #allocation4 [shape = 's32[1]{0}', space=sflag, size = 0x4, scoped, tag = 'scoped memory for tpu_custom_call.1']
    #allocation5 [shape = 'u8[512]{0}', space=vmem, size = 0x400, scoped, tag = 'output window, operand 0, single buffered']
    %8 = vsyncpa [#allocation3], 0
    %9 = vsyncpa [#allocation4], 0
    // Predicated region
    $region2: #{tpu_custom_call.1} parent=1 // pred_check
      _
    $region3: #{tpu_custom_call.1} parent=1 // pred_check_branch
      %11 = sbr.rel (0) target = $region5
    $region4: #{tpu_custom_call.1} parent=1 // pred_region
      %s13 = ssub.s32 16, 16
      %14 = vsyncadd [#allocation3], %s13
      %s16 = sshll.u32 [#allocation2], 4
      %s17 = int_to_ptr.vmem [resolvable:$true] %s16
      %19 = dma.hbm_to_vmem [thread:$0]  %s0, 16, %s17, [#allocation3]
    $region5: #{tpu_custom_call.1} parent=1 // pred_fallthru
      _
    // Predicated region
    $region6: #{tpu_custom_call.1} parent=1 // pred_check
      _
    $region7: #{tpu_custom_call.1} parent=1 // pred_check_branch
      %21 = sbr.rel (0) target = $region9
    $region8: #{tpu_custom_call.1} parent=1 // pred_region
      _
    $region9: #{tpu_custom_call.1} parent=1 // pred_fallthru
      _
    // Predicated region
    $region10: #{tpu_custom_call.1} parent=1 // pred_check
      _
    $region11: #{tpu_custom_call.1} parent=1 // pred_check_branch
      %23 = sbr.rel (0) target = $region13
    $region12: #{tpu_custom_call.1} parent=1 // pred_region
      _
    $region13: #{tpu_custom_call.1} parent=1 // pred_fallthru
      _
    // Predicated region
    $region14: #{tpu_custom_call.1} parent=1 // pred_check
      _
    $region15: #{tpu_custom_call.1} parent=1 // pred_check_branch
      %25 = sbr.rel (0) target = $region17
    $region16: #{tpu_custom_call.1} parent=1 // pred_region
      %26 = dma.done [#allocation3], 16
    $region17: #{tpu_custom_call.1} parent=1 // pred_fallthru
      _
    %v27 = vld [vmem:[#allocation2] sm:$0x1]
    %v28 = vld [vmem:[%s1] sm:$0x3]
    %30 = vset.pattern.permute.xlu0 0
    %31 = vperm.xlu0 %30, %v27
    %v32 = vpop.permute.xlu0 %31
    %v34 = vlaneseq
    %v35 = vshrl.u32 %v34, 7
    %v36 = vsub.s32 0, %v35
    %v37 = vrot.slane %v32, %v36
    %v38 = vmul.f32 %v37, %v28
    %39 = vset.pattern.permute.xlu0 1
    %40 = vperm.xlu0 %39, %v27
    %v41 = vpop.permute.xlu0 %40
    %v43 = vlaneseq
    %v44 = vshrl.u32 %v43, 7
    %v45 = vsub.s32 0, %v44
    %v46 = vrot.slane %v41, %v45
    %v47 = vmul.f32 %v46, %v28
    %v49 = vrot.slane %v47, 1
    %v51 = vadd.f32 %v38, %v49
    %v52 = vld [vmem:[%s2] sm:$0x1]
    %v53 = vadd.f32 %v51, %v52
    %vm54 = vcmask 16384
    %55 = vst.msk [vmem:[#allocation5] sm:$0x1] %vm54, %v53
    // Predicated region
    $region18: #{tpu_custom_call.1} parent=1 // pred_check
      _
    $region19: #{tpu_custom_call.1} parent=1 // pred_check_branch
      %57 = sbr.rel (0) target = $region21
    $region20: #{tpu_custom_call.1} parent=1 // pred_region
      %s59 = ssub.s32 16, 16
      %60 = vsyncadd [#allocation4], %s59
      %s62 = sshll.u32 [#allocation5], 4
      %s63 = int_to_ptr.vmem [resolvable:$true] %s62
      %65 = dma.vmem_to_hbm [thread:$0]  %s63, 16, %s3, [#allocation4]
    $region21: #{tpu_custom_call.1} parent=1 // pred_fallthru
      _
    // Predicated region
    $region22: #{tpu_custom_call.1} parent=1 // pred_check
      _
    $region23: #{tpu_custom_call.1} parent=1 // pred_check_branch
      %67 = sbr.rel (0) target = $region25
    $region24: #{tpu_custom_call.1} parent=1 // pred_region
      %68 = dma.done [#allocation4], 16
    $region25: #{tpu_custom_call.1} parent=1 // pred_fallthru
      _
    %69 = vsyncpa [#allocation3], 1
    %70 = vsyncpa [#allocation4], 1

</llo_original>
